<compile_context>
chip_gen: v7x
topology: tpu7x:2x2x1
jax: 0.10.0
libtpu: 0.0.40
codegen_flags: <defaults>
</compile_context>

<pallas_src>
import functools

import jax
import jax.numpy as jnp
from jax.experimental import pallas as pl
from jax.experimental.pallas import tpu as pltpu

LANES = 128
_DEFAULT_TILE_ROWS = 1024          # (1024, 128) f32 block = 512 KiB per input
_CORE_SPLIT = 2                    # megacore (v7x) parallel split; no-op on 1-TC chips
_SMALL_FALLBACK_ELEMS = 128 * 1024  # below this, a fused XLA reduction wins


def _round_up(x, m):
    return ((x + m - 1) // m) * m


def _mse_partial_kernel(pred_ref, gt_ref, out_ref):
    """Accumulate per-core partial sums of squared differences.

    The output block is resident across the (arbitrary) reduction axis, so it
    acts as a lane-dense f32 accumulator: only VPU sub/mul/add per step, no
    cross-lane reduce and no scalar read-modify-write inside the loop.
    """
    i = pl.program_id(1)  # reduction axis

    @pl.when(i == 0)
    def _():
        out_ref[...] = jnp.zeros_like(out_ref)

    d = pred_ref[...].astype(jnp.float32) - gt_ref[...].astype(jnp.float32)
    out_ref[...] += d * d


def mse_loss_pallas(pred, gt, *, tile_rows=_DEFAULT_TILE_ROWS, force_pallas=False):
    """F.mse_loss(pred, gt) (mean reduction) via a Pallas streaming reduction."""
    assert pred.shape == gt.shape, (pred.shape, gt.shape)
    n = pred.size

    # Tiny tensors: a pallas_call is pure dispatch overhead — use fused XLA.
    if n < _SMALL_FALLBACK_ELEMS and not force_pallas:
        d = pred.astype(jnp.float32) - gt.astype(jnp.float32)
        return jnp.mean(d * d)

    # ---- choose tiling (works for ragged shapes via zero padding) ----
    rows_needed = -(-n // LANES)                                   # ceil(n / 128)
    tile_rows_eff = max(16, min(int(tile_rows), _round_up(rows_needed, 16)))
    tile_rows_eff = _round_up(tile_rows_eff, 16)                   # bf16 sublane packing
    num_cores = _CORE_SPLIT if rows_needed >= _CORE_SPLIT * tile_rows_eff else 1
    rows_padded = _round_up(rows_needed, num_cores * tile_rows_eff)
    blocks_per_core = rows_padded // (num_cores * tile_rows_eff)
    n_padded = rows_padded * LANES

    # ---- flatten + zero-pad both operands (padding contributes 0 to SSE) ----
    p_flat = pred.reshape(-1)
    g_flat = gt.reshape(-1)
    pad = n_padded - n
    if pad:
        p_flat = jnp.pad(p_flat, (0, pad))
        g_flat = jnp.pad(g_flat, (0, pad))
    p2 = p_flat.reshape(rows_padded, LANES)
    g2 = g_flat.reshape(rows_padded, LANES)

    in_index = lambda c, i: (c * blocks_per_core + i, 0)
    out_index = lambda c, i: (c, 0)   # resident across the reduction axis

    partials = pl.pallas_call(
        _mse_partial_kernel,
        out_shape=jax.ShapeDtypeStruct((num_cores * tile_rows_eff, LANES), jnp.float32),
        grid_spec=pltpu.PrefetchScalarGridSpec(
            num_scalar_prefetch=0,
            grid=(num_cores, blocks_per_core),
            in_specs=[
                pl.BlockSpec((tile_rows_eff, LANES), in_index),
                pl.BlockSpec((tile_rows_eff, LANES), in_index),
            ],
            out_specs=pl.BlockSpec((tile_rows_eff, LANES), out_index),
        ),
        compiler_params=pltpu.CompilerParams(
            dimension_semantics=("parallel", "arbitrary"),
        ),
    )(p2, g2)

    # Single final cross-lane reduction + mean scale on a tiny array (XLA).
    return jnp.sum(partials) * jnp.float32(1.0 / float(n))


class SingleTaskLoss:
    """JAX port of losses/loss_schemes.py::SingleTaskLoss."""

    def __init__(self, loss_ft, task):
        self.loss_ft = loss_ft
        self.task = task

    def __call__(self, pred, gt):
        out = {self.task: self.loss_ft(pred[self.task], gt[self.task])}
        out['total'] = out[self.task]
        return out


if __name__ == "__main__":
    key = jax.random.PRNGKey(0)
    k1, k2, k3, k4 = jax.random.split(key, 4)

    # --- SingleTaskLoss forward at a small NCHW shape: batch=2, ch=4, 16x16 ---
    task = "depth"
    shape = (2, 4, 16, 16)
    pred_map = jax.random.normal(k1, shape, dtype=jnp.float32)
    gt_map = jax.random.normal(k2, shape, dtype=jnp.float32)

    loss_fn = functools.partial(mse_loss_pallas, force_pallas=True)
    loss_module = SingleTaskLoss(loss_fn, task)
    out = loss_module({task: pred_map}, {task: gt_map})
    out = jax.tree_util.tree_map(jax.block_until_ready, out)

    ref = jnp.mean((pred_map - gt_map) ** 2)
    assert jnp.allclose(out[task], ref, rtol=1e-5, atol=1e-6), (out[task], ref)
    assert jnp.allclose(out["total"], out[task])

    # --- Second check: ragged bf16 shape exercising zero padding, multi-step
    #     accumulation, and the 2-way parallel (megacore) grid axis. ---
    shape2 = (2, 3, 60, 130)   # 46800 elems; does not tile evenly into (64,128)
    p2 = jax.random.normal(k3, shape2, dtype=jnp.bfloat16)
    g2 = jax.random.normal(k4, shape2, dtype=jnp.bfloat16)
    got2 = jax.block_until_ready(
        mse_loss_pallas(p2, g2, tile_rows=64, force_pallas=True))
    ref2 = jnp.mean((p2.astype(jnp.float32) - g2.astype(jnp.float32)) ** 2)
    assert jnp.allclose(got2, ref2, rtol=1e-5, atol=1e-5), (got2, ref2)

    print("KERNEL_OK")
</pallas_src>

<mosaic_0001>
module attributes {stable_mosaic.version = 11 : i64} {
  func.func @_mse_partial_kernel(%arg0: i32, %arg1: i32, %arg2: memref<16x128xf32, #tpu.memory_space<vmem>>, %arg3: memref<16x128xf32, #tpu.memory_space<vmem>>, %arg4: memref<16x128xf32, #tpu.memory_space<vmem>>) attributes {dimension_semantics = [#tpu.dimension_semantics<parallel>, #tpu.dimension_semantics<arbitrary>], iteration_bounds = array<i64: 1, 1>, scalar_prefetch = 0 : i64, scratch_operands = 0 : i64, tpu.core_type = #tpu.core_type<tc>, window_params = [{transform_indices = @transform_0, window_bounds = array<i64: 16, 128>}, {transform_indices = @transform_1, window_bounds = array<i64: 16, 128>}, {transform_indices = @transform_2, window_bounds = array<i64: 16, 128>}]} {
    %c0_i32 = arith.constant 0 : i32
    %0 = arith.cmpi eq, %arg1, %c0_i32 : i32
    %1 = arith.extui %0 : i1 to i32
    %c0_i32_0 = arith.constant 0 : i32
    %2 = arith.cmpi ne, %1, %c0_i32_0 : i32
    scf.if %2 {
      %cst = arith.constant 0.000000e+00 : f32
      %10 = vector.broadcast %cst : f32 to vector<16x128xf32>
      %c0_8 = arith.constant 0 : index
      %c0_9 = arith.constant 0 : index
      %11 = vector.load %arg4[%c0_8, %c0_9] : memref<16x128xf32, #tpu.memory_space<vmem>>, vector<16x128xf32>
      tpu.vector_store %arg4[%c0_8, %c0_9], %10 {strides = array<i32>} : memref<16x128xf32, #tpu.memory_space<vmem>>, vector<16x128xf32>,
    } else {
    }
    %c0 = arith.constant 0 : index
    %c0_1 = arith.constant 0 : index
    %3 = vector.load %arg2[%c0, %c0_1] : memref<16x128xf32, #tpu.memory_space<vmem>>, vector<16x128xf32>
    %c0_2 = arith.constant 0 : index
    %c0_3 = arith.constant 0 : index
    %4 = vector.load %arg3[%c0_2, %c0_3] : memref<16x128xf32, #tpu.memory_space<vmem>>, vector<16x128xf32>
    %5 = arith.subf %3, %4 : vector<16x128xf32>
    %c0_4 = arith.constant 0 : index
    %c0_5 = arith.constant 0 : index
    %6 = vector.load %arg4[%c0_4, %c0_5] : memref<16x128xf32, #tpu.memory_space<vmem>>, vector<16x128xf32>
    %7 = arith.mulf %5, %5 : vector<16x128xf32>
    %8 = arith.addf %6, %7 : vector<16x128xf32>
    %c0_6 = arith.constant 0 : index
    %c0_7 = arith.constant 0 : index
    %9 = vector.load %arg4[%c0_6, %c0_7] : memref<16x128xf32, #tpu.memory_space<vmem>>, vector<16x128xf32>
    tpu.vector_store %arg4[%c0_6, %c0_7], %8 {strides = array<i32>} : memref<16x128xf32, #tpu.memory_space<vmem>>, vector<16x128xf32>,
    return
  }
  func.func @transform_0(%arg0: i32, %arg1: i32) -> (i32, i32) {
    %c1_i32 = arith.constant 1 : i32
    %0 = arith.muli %arg0, %c1_i32 : i32
    %1 = arith.addi %0, %arg1 : i32
    %c0_i32 = arith.constant 0 : i32
    %c0_i32_0 = arith.constant 0 : i32
    return %1, %c0_i32 : i32, i32
  }
  func.func @transform_1(%arg0: i32, %arg1: i32) -> (i32, i32) {
    %c1_i32 = arith.constant 1 : i32
    %0 = arith.muli %arg0, %c1_i32 : i32
    %1 = arith.addi %0, %arg1 : i32
    %c0_i32 = arith.constant 0 : i32
    %c0_i32_0 = arith.constant 0 : i32
    return %1, %c0_i32 : i32, i32
  }
  func.func @transform_2(%arg0: i32, %arg1: i32) -> (i32, i32) {
    %c0_i32 = arith.constant 0 : i32
    %c0_i32_0 = arith.constant 0 : i32
    return %arg0, %c0_i32 : i32, i32
  }
}

</mosaic_0001>

<llo_original>
// kernel: tpu_custom_call.1
$region0: #{tpu_custom_call.1}
  #allocation0 [shape = 'u32[]', space=smem, size = 0x4, offset = 0x4, fixed_abs, tag = 'smem constant byte address 0x4 - core index']
  #allocation1 [shape = 'u32[144,128]{1,0:T(1,128)}', space=vmem, size = 0x12000, scoped, tag = 'internal scratch']
  %s0 = inlined_call_operand.hbm [shape: f32[16,128], index: 0, kind: input, shape index: {}]
  %s1 = inlined_call_operand.hbm [shape: f32[16,128], index: 1, kind: input, shape index: {}]
  %s2 = inlined_call_operand.hbm [shape: f32[16,128], index: 2, kind: output, shape index: {}]
  %s3 = sld [smem:[#allocation0]]
  $region30: #{tpu_custom_call.1} parent=0
    _
  %s5 = ssub.s32 1, %s3
  %s6 = scalar_select 0, %s5, %s3
  $region1: #{tpu_custom_call.1} parent=0
    #allocation2 [shape = 'u8[8192]{0}', space=vmem, size = 0x2000, scoped, tag = 'input window, operand 0, single buffered']
    #allocation3 [shape = 's32[1]{0}', space=sflag, size = 0x4, scoped, tag = 'scoped memory for tpu_custom_call.1']
    #allocation4 [shape = 's32[1]{0}', space=sflag, size = 0x4, scoped, tag = 'scoped memory for tpu_custom_call.1']
    #allocation5 [shape = 'u8[8192]{0}', space=vmem, size = 0x2000, scoped, tag = 'input window, operand 1, single buffered']
    #allocation6 [shape = 's32[1]{0}', space=sflag, size = 0x4, scoped, tag = 'scoped memory for tpu_custom_call.1']
    #allocation7 [shape = 'u8[8192]{0}', space=vmem, size = 0x2000, scoped, tag = 'output window, operand 0, single buffered']
    %7 = vsyncpa [#allocation3], 0
    %8 = vsyncpa [#allocation6], 0
    %9 = vsyncpa [#allocation4], 0
    // Predicated region
    $region2: #{tpu_custom_call.1} parent=1 // pred_check
      _
    $region3: #{tpu_custom_call.1} parent=1 // pred_check_branch
      %11 = sbr.rel (0) target = $region5
    $region4: #{tpu_custom_call.1} parent=1 // pred_region
      %s12 = sadd.s32 0, 0
      %s13 = smul.u32 2, %s12
      %s15 = ssub.s32 256, 256
      %16 = vsyncadd [#allocation3], %s15
      %s17 = smul.addr %s13, 128
      %s18 = scalar_lea.hbm %s0, %s17
      %s19 = sshll.u32 [#allocation2], 4
      %s20 = int_to_ptr.vmem [resolvable:$true] %s19
      %25 = dma.hbm_to_vmem [thread:$0]  %s18, 256, %s20, [#allocation3], 128, 128, 8
    $region5: #{tpu_custom_call.1} parent=1 // pred_fallthru
      _
    // Predicated region
    $region6: #{tpu_custom_call.1} parent=1 // pred_check
      _
    $region7: #{tpu_custom_call.1} parent=1 // pred_check_branch
      %27 = sbr.rel (0) target = $region9
    $region8: #{tpu_custom_call.1} parent=1 // pred_region
      %s28 = sadd.s32 0, 0
      %s29 = smul.u32 2, %s28
      %s31 = ssub.s32 256, 256
      %32 = vsyncadd [#allocation6], %s31
      %s33 = smul.addr %s29, 128
      %s34 = scalar_lea.hbm %s1, %s33
      %s35 = sshll.u32 [#allocation5], 4
      %s36 = int_to_ptr.vmem [resolvable:$true] %s35
      %41 = dma.hbm_to_vmem [thread:$0]  %s34, 256, %s36, [#allocation6], 128, 128, 8
    $region9: #{tpu_custom_call.1} parent=1 // pred_fallthru
      _
    // Predicated region
    $region10: #{tpu_custom_call.1} parent=1 // pred_check
      _
    $region11: #{tpu_custom_call.1} parent=1 // pred_check_branch
      %43 = sbr.rel (0) target = $region13
    $region12: #{tpu_custom_call.1} parent=1 // pred_region
      %44 = dma.done [#allocation3], 256
    $region13: #{tpu_custom_call.1} parent=1 // pred_fallthru
      _
    // Predicated region
    $region14: #{tpu_custom_call.1} parent=1 // pred_check
      _
    $region15: #{tpu_custom_call.1} parent=1 // pred_check_branch
      %46 = sbr.rel (0) target = $region17
    $region16: #{tpu_custom_call.1} parent=1 // pred_region
      %47 = dma.done [#allocation6], 256
    $region17: #{tpu_custom_call.1} parent=1 // pred_fallthru
      _
    %s48 = sadd.s32 0, 0
    %s49 = smul.u32 2, %s48
    %s50 = sadd.s32 0, 0
    %s51 = smul.u32 2, %s50
    %p52 = scmp.eq.s32.totalorder 0, 0
    // Predicated region
    $region18: #{tpu_custom_call.1} parent=1 // pred_check
      %p53 = pneg %p52
    $region19: #{tpu_custom_call.1} parent=1 // pred_check_branch
      %55 = sbr.rel (%p53) target = $region21
    $region20: #{tpu_custom_call.1} parent=1 // pred_region
      %56 = vst [vmem:[#allocation7] sm:$0xff] 0.0
      %57 = vst [vmem:[#allocation7 + $0x8] sm:$0xff] 0.0
    $region21: #{tpu_custom_call.1} parent=1 // pred_fallthru
      _
    %v58 = vld [vmem:[#allocation2] sm:$0xff]
    %v59 = vld [vmem:[#allocation2 + $0x8] sm:$0xff]
    %v60 = vld [vmem:[#allocation5] sm:$0xff]
    %v61 = vld [vmem:[#allocation5 + $0x8] sm:$0xff]
    %v62 = vsub.f32 %v58, %v60
    %v63 = vsub.f32 %v59, %v61
    %v64 = vld [vmem:[#allocation7] sm:$0xff]
    %v65 = vld [vmem:[#allocation7 + $0x8] sm:$0xff]
    %v66 = vmul.f32 %v62, %v62
    %v67 = vmul.f32 %v63, %v63
    %v68 = vadd.f32 %v64, %v66
    %v69 = vadd.f32 %v65, %v67
    %70 = vst [vmem:[#allocation7] sm:$0xff] %v68
    %71 = vst [vmem:[#allocation7 + $0x8] sm:$0xff] %v69
    // Predicated region
    $region22: #{tpu_custom_call.1} parent=1 // pred_check
      _
    $region23: #{tpu_custom_call.1} parent=1 // pred_check_branch
      %73 = sbr.rel (0) target = $region25
    $region24: #{tpu_custom_call.1} parent=1 // pred_region
      %s75 = ssub.s32 256, 256
      %76 = vsyncadd [#allocation4], %s75
      %s77 = sshll.u32 [#allocation7], 4
      %s78 = int_to_ptr.vmem [resolvable:$true] %s77
      %83 = dma.vmem_to_hbm [thread:$0]  %s78, 256, %s2, [#allocation4], 128, 128, 8
    $region25: #{tpu_custom_call.1} parent=1 // pred_fallthru
      _
    // Predicated region
    $region26: #{tpu_custom_call.1} parent=1 // pred_check
      _
    $region27: #{tpu_custom_call.1} parent=1 // pred_check_branch
      %85 = sbr.rel (0) target = $region29
    $region28: #{tpu_custom_call.1} parent=1 // pred_region
      %86 = dma.done [#allocation4], 256
    $region29: #{tpu_custom_call.1} parent=1 // pred_fallthru
      _
    %87 = vsyncpa [#allocation3], 1
    %88 = vsyncpa [#allocation6], 1
    %89 = vsyncpa [#allocation4], 1

</llo_original>
